<compile_context>
chip_gen: v5e
topology: v5e:2x2
jax: 0.10.0
libtpu: 0.0.40
codegen_flags: <defaults>
</compile_context>

<pallas_src>
import jax
import jax.numpy as jnp
from jax.experimental import pallas as pl
from jax.experimental.pallas import tpu as pltpu


def _refine_kernel(edge_ref, diag_all_ref, diag_i_ref, n1_ref, n2_ref,
                   w_edge_ref, w_ei_ref, w_ej_ref, w_n1_ref, w_n2_ref, b_ref,
                   out_ref):
    # Block shapes (per grid step (b, it)):
    #   edge_ref:     (1, TI, S, E)
    #   diag_all_ref: (1, S, E)    -- full diagonal rows  (j-dependent term)
    #   diag_i_ref:   (1, TI, E)   -- diagonal rows of this i-tile (i-term)
    #   n1_ref/n2_ref:(1, TI, S, H)
    #   w_*_ref:      (De, E) / (De, H)
    #   b_ref:        (1, De)
    #   out_ref:      (1, TI, S, De)
    ti, s, e = edge_ref.shape[1], edge_ref.shape[2], edge_ref.shape[3]
    h = n1_ref.shape[3]
    de = out_ref.shape[3]

    # Contract the last dim of x with the last dim of W  (i.e. x @ W.T)
    # without any explicit transpose.
    cdims = (((1,), (1,)), ((), ()))

    edge = edge_ref[0].reshape(ti * s, e)
    n1 = n1_ref[0].reshape(ti * s, h)
    n2 = n2_ref[0].reshape(ti * s, h)

    acc = jax.lax.dot_general(edge, w_edge_ref[...], cdims,
                              preferred_element_type=jnp.float32)
    acc += jax.lax.dot_general(n1, w_n1_ref[...], cdims,
                               preferred_element_type=jnp.float32)
    acc += jax.lax.dot_general(n2, w_n2_ref[...], cdims,
                               preferred_element_type=jnp.float32)
    acc = acc.reshape(ti, s, de)

    # edge_i[b, i, j] = diag[b, j]  ->  proj_j[j, :] broadcast over i.
    # Fold the Linear bias into this term (added exactly once per (i, j)).
    proj_j = jax.lax.dot_general(diag_all_ref[0], w_ei_ref[...], cdims,
                                 preferred_element_type=jnp.float32)
    proj_j = proj_j + b_ref[...]                       # (S, De)

    # edge_j[b, i, j] = diag[b, i]  ->  proj_i[i, :] broadcast over j.
    proj_i = jax.lax.dot_general(diag_i_ref[0], w_ej_ref[...], cdims,
                                 preferred_element_type=jnp.float32)  # (TI, De)

    out = acc + proj_j[None, :, :] + proj_i[:, None, :]
    out_ref[0] = out.astype(out_ref.dtype)


def refining_forward(edge, node1, node2, weight, bias, *, tile_i=None):
    """edge: (B,S,S,E), node1/node2: (B,S,S,H), weight: (De, 3E+2H), bias: (De,).

    Returns (B, S, S, De), matching RefiningStrategy.forward.
    """
    B, S, S2, E = edge.shape
    assert S == S2
    H = node1.shape[-1]
    De, F = weight.shape
    assert F == 3 * E + 2 * H
    assert node2.shape == (B, S, S, H)

    # Diagonal rows edge[b, s, s, :] -- tiny (B, S, E) gather, done as glue.
    idx = jnp.arange(S)
    edge_diag = edge[:, idx, idx, :]

    # Algebraic split of the Linear weight over the concatenated feature order
    # [edge, edge_i, edge_j, node1, node2]  (avoids materializing the concat).
    w_edge = weight[:, 0:E]
    w_ei = weight[:, E:2 * E]          # applied to diag[b, j]
    w_ej = weight[:, 2 * E:3 * E]      # applied to diag[b, i]
    w_n1 = weight[:, 3 * E:3 * E + H]
    w_n2 = weight[:, 3 * E + H:]
    b2 = bias.reshape(1, De)

    # i-tiling: keep per-step VMEM bounded for large S.  Block-shape rule:
    # tile_i must be a multiple of 8 or equal to S.
    if tile_i is None:
        tile_i = S if (S <= 256 or S % 128 != 0) else 128
    assert S % tile_i == 0 and (tile_i == S or tile_i % 8 == 0)
    n_i = S // tile_i

    flops = 2 * B * S * S * De * (E + 2 * H) + 4 * B * S * De * E
    bytes_accessed = 4 * (edge.size + node1.size + node2.size
                          + weight.size + bias.size + B * S * S * De)

    out = pl.pallas_call(
        _refine_kernel,
        out_shape=jax.ShapeDtypeStruct((B, S, S, De), edge.dtype),
        grid_spec=pltpu.PrefetchScalarGridSpec(
            num_scalar_prefetch=0,
            grid=(B, n_i),
            in_specs=[
                pl.BlockSpec((1, tile_i, S, E), lambda b, i: (b, i, 0, 0)),
                pl.BlockSpec((1, S, E), lambda b, i: (b, 0, 0)),
                pl.BlockSpec((1, tile_i, E), lambda b, i: (b, i, 0)),
                pl.BlockSpec((1, tile_i, S, H), lambda b, i: (b, i, 0, 0)),
                pl.BlockSpec((1, tile_i, S, H), lambda b, i: (b, i, 0, 0)),
                pl.BlockSpec((De, E), lambda b, i: (0, 0)),
                pl.BlockSpec((De, E), lambda b, i: (0, 0)),
                pl.BlockSpec((De, E), lambda b, i: (0, 0)),
                pl.BlockSpec((De, H), lambda b, i: (0, 0)),
                pl.BlockSpec((De, H), lambda b, i: (0, 0)),
                pl.BlockSpec((1, De), lambda b, i: (0, 0)),
            ],
            out_specs=pl.BlockSpec((1, tile_i, S, De),
                                   lambda b, i: (b, i, 0, 0)),
        ),
        compiler_params=pltpu.CompilerParams(
            dimension_semantics=("parallel", "parallel")),
        cost_estimate=pl.CostEstimate(
            flops=flops, transcendentals=0, bytes_accessed=bytes_accessed),
    )(edge, edge_diag, edge_diag, node1, node2,
      w_edge, w_ei, w_ej, w_n1, w_n2, b2)
    return out


def refining_reference(edge, node1, node2, weight, bias):
    """Pure-JAX transcription of the PyTorch forward, for verification."""
    B, S, _, E = edge.shape
    idx = jnp.arange(S)
    edge_diag = edge[:, idx, idx, :]                                  # (B,S,E)
    edge_i = jnp.broadcast_to(edge_diag[:, None, :, :], (B, S, S, E))
    edge_j = jnp.transpose(edge_i, (0, 2, 1, 3))
    node = jnp.concatenate([node1, node2], axis=-1)
    feat = jnp.concatenate([edge, edge_i, edge_j, node], axis=-1)
    out = jnp.einsum("bijf,of->bijo", feat, weight,
                     precision=jax.lax.Precision.HIGHEST)
    return out + bias


if __name__ == "__main__":
    B, S = 2, 8
    hidden_dim, edge_dim, dim_e = 32, 16, 32
    in_features = 2 * hidden_dim + 3 * edge_dim   # = 112

    key = jax.random.PRNGKey(0)
    ke, k1, k2, kw, kb = jax.random.split(key, 5)
    edge = jax.random.normal(ke, (B, S, S, edge_dim), dtype=jnp.float32)
    node1 = jax.random.normal(k1, (B, S, S, hidden_dim), dtype=jnp.float32)
    node2 = jax.random.normal(k2, (B, S, S, hidden_dim), dtype=jnp.float32)

    # Deterministic stand-in for nn.Linear's weight/bias initialization.
    bound = 1.0 / jnp.sqrt(jnp.float32(in_features))
    weight = (jax.random.uniform(kw, (dim_e, in_features), dtype=jnp.float32)
              - 0.5) * 2.0 * bound
    bias = (jax.random.uniform(kb, (dim_e,), dtype=jnp.float32)
            - 0.5) * 2.0 * bound

    out = refining_forward(edge, node1, node2, weight, bias)
    out = jax.block_until_ready(out)

    ref = refining_reference(edge, node1, node2, weight, bias)
    assert out.shape == (B, S, S, dim_e)
    assert jnp.allclose(out, ref, atol=1e-4, rtol=1e-4)

    print("KERNEL_OK")
</pallas_src>

<mosaic_0001>
module attributes {stable_mosaic.version = 11 : i64} {
  func.func @_refine_kernel(%arg0: i32, %arg1: i32, %arg2: memref<1x8x8x16xf32, #tpu.memory_space<vmem>>, %arg3: memref<1x8x16xf32, #tpu.memory_space<vmem>>, %arg4: memref<1x8x16xf32, #tpu.memory_space<vmem>>, %arg5: memref<1x8x8x32xf32, #tpu.memory_space<vmem>>, %arg6: memref<1x8x8x32xf32, #tpu.memory_space<vmem>>, %arg7: memref<32x16xf32, #tpu.memory_space<vmem>>, %arg8: memref<32x16xf32, #tpu.memory_space<vmem>>, %arg9: memref<32x16xf32, #tpu.memory_space<vmem>>, %arg10: memref<32x32xf32, #tpu.memory_space<vmem>>, %arg11: memref<32x32xf32, #tpu.memory_space<vmem>>, %arg12: memref<1x32xf32, #tpu.memory_space<vmem>>, %arg13: memref<1x8x8x32xf32, #tpu.memory_space<vmem>>) attributes {dimension_semantics = [#tpu.dimension_semantics<parallel>, #tpu.dimension_semantics<parallel>], iteration_bounds = array<i64: 2, 1>, scalar_prefetch = 0 : i64, scratch_operands = 0 : i64, tpu.core_type = #tpu.core_type<tc>, window_params = [{transform_indices = @transform_0, window_bounds = array<i64: 1, 8, 8, 16>}, {transform_indices = @transform_1, window_bounds = array<i64: 1, 8, 16>}, {transform_indices = @transform_2, window_bounds = array<i64: 1, 8, 16>}, {transform_indices = @transform_3, window_bounds = array<i64: 1, 8, 8, 32>}, {transform_indices = @transform_4, window_bounds = array<i64: 1, 8, 8, 32>}, {pipeline_mode = #tpu.pipeline_mode<synchronous>, transform_indices = @transform_5, window_bounds = array<i64: 32, 16>}, {pipeline_mode = #tpu.pipeline_mode<synchronous>, transform_indices = @transform_6, window_bounds = array<i64: 32, 16>}, {pipeline_mode = #tpu.pipeline_mode<synchronous>, transform_indices = @transform_7, window_bounds = array<i64: 32, 16>}, {pipeline_mode = #tpu.pipeline_mode<synchronous>, transform_indices = @transform_8, window_bounds = array<i64: 32, 32>}, {pipeline_mode = #tpu.pipeline_mode<synchronous>, transform_indices = @transform_9, window_bounds = array<i64: 32, 32>}, {pipeline_mode = #tpu.pipeline_mode<synchronous>, transform_indices = @transform_10, window_bounds = array<i64: 1, 32>}, {transform_indices = @transform_11, window_bounds = array<i64: 1, 8, 8, 32>}]} {
    %c0 = arith.constant 0 : index
    %c0_0 = arith.constant 0 : index
    %c0_1 = arith.constant 0 : index
    %c0_2 = arith.constant 0 : index
    %0 = vector.load %arg2[%c0, %c0_0, %c0_1, %c0_2] : memref<1x8x8x16xf32, #tpu.memory_space<vmem>>, vector<1x8x8x16xf32>
    %1 = vector.shape_cast %0 : vector<1x8x8x16xf32> to vector<8x8x16xf32>
    %2 = vector.shape_cast %1 : vector<8x8x16xf32> to vector<64x16xf32>
    %c0_3 = arith.constant 0 : index
    %c0_4 = arith.constant 0 : index
    %c0_5 = arith.constant 0 : index
    %c0_6 = arith.constant 0 : index
    %3 = vector.load %arg5[%c0_3, %c0_4, %c0_5, %c0_6] : memref<1x8x8x32xf32, #tpu.memory_space<vmem>>, vector<1x8x8x32xf32>
    %4 = vector.shape_cast %3 : vector<1x8x8x32xf32> to vector<8x8x32xf32>
    %5 = vector.shape_cast %4 : vector<8x8x32xf32> to vector<64x32xf32>
    %c0_7 = arith.constant 0 : index
    %c0_8 = arith.constant 0 : index
    %c0_9 = arith.constant 0 : index
    %c0_10 = arith.constant 0 : index
    %6 = vector.load %arg6[%c0_7, %c0_8, %c0_9, %c0_10] : memref<1x8x8x32xf32, #tpu.memory_space<vmem>>, vector<1x8x8x32xf32>
    %7 = vector.shape_cast %6 : vector<1x8x8x32xf32> to vector<8x8x32xf32>
    %8 = vector.shape_cast %7 : vector<8x8x32xf32> to vector<64x32xf32>
    %c0_11 = arith.constant 0 : index
    %c0_12 = arith.constant 0 : index
    %9 = vector.load %arg7[%c0_11, %c0_12] : memref<32x16xf32, #tpu.memory_space<vmem>>, vector<32x16xf32>
    %cst = arith.constant dense<0.000000e+00> : vector<64x32xf32>
    %10 = tpu.matmul %2, %9, %cst {dimension_numbers = #tpu.dot_dimension_numbers<[1], [1], [0], [0], [0, 0, 1, 0], [], []>} : vector<64x16xf32>, vector<32x16xf32>, vector<64x32xf32> -> vector<64x32xf32>
    %c0_13 = arith.constant 0 : index
    %c0_14 = arith.constant 0 : index
    %11 = vector.load %arg10[%c0_13, %c0_14] : memref<32x32xf32, #tpu.memory_space<vmem>>, vector<32x32xf32>
    %cst_15 = arith.constant dense<0.000000e+00> : vector<64x32xf32>
    %12 = tpu.matmul %5, %11, %cst_15 {dimension_numbers = #tpu.dot_dimension_numbers<[1], [1], [0], [0], [0, 0, 1, 0], [], []>} : vector<64x32xf32>, vector<32x32xf32>, vector<64x32xf32> -> vector<64x32xf32>
    %13 = arith.addf %10, %12 : vector<64x32xf32>
    %c0_16 = arith.constant 0 : index
    %c0_17 = arith.constant 0 : index
    %14 = vector.load %arg11[%c0_16, %c0_17] : memref<32x32xf32, #tpu.memory_space<vmem>>, vector<32x32xf32>
    %cst_18 = arith.constant dense<0.000000e+00> : vector<64x32xf32>
    %15 = tpu.matmul %8, %14, %cst_18 {dimension_numbers = #tpu.dot_dimension_numbers<[1], [1], [0], [0], [0, 0, 1, 0], [], []>} : vector<64x32xf32>, vector<32x32xf32>, vector<64x32xf32> -> vector<64x32xf32>
    %16 = arith.addf %13, %15 : vector<64x32xf32>
    %17 = vector.shape_cast %16 : vector<64x32xf32> to vector<8x8x32xf32>
    %c0_19 = arith.constant 0 : index
    %c0_20 = arith.constant 0 : index
    %c0_21 = arith.constant 0 : index
    %18 = vector.load %arg3[%c0_19, %c0_20, %c0_21] : memref<1x8x16xf32, #tpu.memory_space<vmem>>, vector<1x8x16xf32>
    %19 = vector.shape_cast %18 : vector<1x8x16xf32> to vector<8x16xf32>
    %c0_22 = arith.constant 0 : index
    %c0_23 = arith.constant 0 : index
    %20 = vector.load %arg8[%c0_22, %c0_23] : memref<32x16xf32, #tpu.memory_space<vmem>>, vector<32x16xf32>
    %cst_24 = arith.constant dense<0.000000e+00> : vector<8x32xf32>
    %21 = tpu.matmul %19, %20, %cst_24 {dimension_numbers = #tpu.dot_dimension_numbers<[1], [1], [0], [0], [0, 0, 1, 0], [], []>} : vector<8x16xf32>, vector<32x16xf32>, vector<8x32xf32> -> vector<8x32xf32>
    %c0_25 = arith.constant 0 : index
    %c0_26 = arith.constant 0 : index
    %22 = vector.load %arg12[%c0_25, %c0_26] : memref<1x32xf32, #tpu.memory_space<vmem>>, vector<1x32xf32>
    %23 = vector.broadcast %22 : vector<1x32xf32> to vector<8x32xf32>
    %24 = arith.addf %21, %23 : vector<8x32xf32>
    %c0_27 = arith.constant 0 : index
    %c0_28 = arith.constant 0 : index
    %c0_29 = arith.constant 0 : index
    %25 = vector.load %arg4[%c0_27, %c0_28, %c0_29] : memref<1x8x16xf32, #tpu.memory_space<vmem>>, vector<1x8x16xf32>
    %26 = vector.shape_cast %25 : vector<1x8x16xf32> to vector<8x16xf32>
    %c0_30 = arith.constant 0 : index
    %c0_31 = arith.constant 0 : index
    %27 = vector.load %arg9[%c0_30, %c0_31] : memref<32x16xf32, #tpu.memory_space<vmem>>, vector<32x16xf32>
    %cst_32 = arith.constant dense<0.000000e+00> : vector<8x32xf32>
    %28 = tpu.matmul %26, %27, %cst_32 {dimension_numbers = #tpu.dot_dimension_numbers<[1], [1], [0], [0], [0, 0, 1, 0], [], []>} : vector<8x16xf32>, vector<32x16xf32>, vector<8x32xf32> -> vector<8x32xf32>
    %29 = vector.shape_cast %24 : vector<8x32xf32> to vector<1x8x32xf32>
    %30 = vector.broadcast %29 : vector<1x8x32xf32> to vector<8x8x32xf32>
    %31 = arith.addf %17, %30 : vector<8x8x32xf32>
    %32 = vector.shape_cast %28 : vector<8x32xf32> to vector<8x1x32xf32>
    %33 = vector.broadcast %32 : vector<8x1x32xf32> to vector<8x8x32xf32>
    %34 = arith.addf %31, %33 : vector<8x8x32xf32>
    %c0_33 = arith.constant 0 : index
    %c0_34 = arith.constant 0 : index
    %c0_35 = arith.constant 0 : index
    %c0_36 = arith.constant 0 : index
    %35 = vector.load %arg13[%c0_33, %c0_34, %c0_35, %c0_36] : memref<1x8x8x32xf32, #tpu.memory_space<vmem>>, vector<1x8x8x32xf32>
    %36 = vector.shape_cast %35 : vector<1x8x8x32xf32> to vector<8x8x32xf32>
    %37 = vector.shape_cast %34 : vector<8x8x32xf32> to vector<1x8x8x32xf32>
    tpu.vector_store %arg13[%c0_33, %c0_34, %c0_35, %c0_36], %37 {strides = array<i32>} : memref<1x8x8x32xf32, #tpu.memory_space<vmem>>, vector<1x8x8x32xf32>,
    return
  }
  func.func @transform_0(%arg0: i32, %arg1: i32) -> (i32, i32, i32, i32) {
    %c0_i32 = arith.constant 0 : i32
    %c0_i32_0 = arith.constant 0 : i32
    %c0_i32_1 = arith.constant 0 : i32
    return %arg0, %arg1, %c0_i32, %c0_i32_0 : i32, i32, i32, i32
  }
  func.func @transform_1(%arg0: i32, %arg1: i32) -> (i32, i32, i32) {
    %c0_i32 = arith.constant 0 : i32
    %c0_i32_0 = arith.constant 0 : i32
    %c0_i32_1 = arith.constant 0 : i32
    return %arg0, %c0_i32, %c0_i32_0 : i32, i32, i32
  }
  func.func @transform_2(%arg0: i32, %arg1: i32) -> (i32, i32, i32) {
    %c0_i32 = arith.constant 0 : i32
    %c0_i32_0 = arith.constant 0 : i32
    return %arg0, %arg1, %c0_i32 : i32, i32, i32
  }
  func.func @transform_3(%arg0: i32, %arg1: i32) -> (i32, i32, i32, i32) {
    %c0_i32 = arith.constant 0 : i32
    %c0_i32_0 = arith.constant 0 : i32
    %c0_i32_1 = arith.constant 0 : i32
    return %arg0, %arg1, %c0_i32, %c0_i32_0 : i32, i32, i32, i32
  }
  func.func @transform_4(%arg0: i32, %arg1: i32) -> (i32, i32, i32, i32) {
    %c0_i32 = arith.constant 0 : i32
    %c0_i32_0 = arith.constant 0 : i32
    %c0_i32_1 = arith.constant 0 : i32
    return %arg0, %arg1, %c0_i32, %c0_i32_0 : i32, i32, i32, i32
  }
  func.func @transform_5(%arg0: i32, %arg1: i32) -> (i32, i32) {
    %c0_i32 = arith.constant 0 : i32
    %c0_i32_0 = arith.constant 0 : i32
    %c0_i32_1 = arith.constant 0 : i32
    return %c0_i32, %c0_i32_0 : i32, i32
  }
  func.func @transform_6(%arg0: i32, %arg1: i32) -> (i32, i32) {
    %c0_i32 = arith.constant 0 : i32
    %c0_i32_0 = arith.constant 0 : i32
    %c0_i32_1 = arith.constant 0 : i32
    return %c0_i32, %c0_i32_0 : i32, i32
  }
  func.func @transform_7(%arg0: i32, %arg1: i32) -> (i32, i32) {
    %c0_i32 = arith.constant 0 : i32
    %c0_i32_0 = arith.constant 0 : i32
    %c0_i32_1 = arith.constant 0 : i32
    return %c0_i32, %c0_i32_0 : i32, i32
  }
  func.func @transform_8(%arg0: i32, %arg1: i32) -> (i32, i32) {
    %c0_i32 = arith.constant 0 : i32
    %c0_i32_0 = arith.constant 0 : i32
    %c0_i32_1 = arith.constant 0 : i32
    return %c0_i32, %c0_i32_0 : i32, i32
  }
  func.func @transform_9(%arg0: i32, %arg1: i32) -> (i32, i32) {
    %c0_i32 = arith.constant 0 : i32
    %c0_i32_0 = arith.constant 0 : i32
    %c0_i32_1 = arith.constant 0 : i32
    return %c0_i32, %c0_i32_0 : i32, i32
  }
  func.func @transform_10(%arg0: i32, %arg1: i32) -> (i32, i32) {
    %c0_i32 = arith.constant 0 : i32
    %c0_i32_0 = arith.constant 0 : i32
    %c0_i32_1 = arith.constant 0 : i32
    return %c0_i32, %c0_i32_0 : i32, i32
  }
  func.func @transform_11(%arg0: i32, %arg1: i32) -> (i32, i32, i32, i32) {
    %c0_i32 = arith.constant 0 : i32
    %c0_i32_0 = arith.constant 0 : i32
    %c0_i32_1 = arith.constant 0 : i32
    return %arg0, %arg1, %c0_i32, %c0_i32_0 : i32, i32, i32, i32
  }
}

</mosaic_0001>

<llo_original>
// kernel: tpu_custom_call.1
$region0: #{tpu_custom_call.1}
  #allocation0 [shape = 'u32[]', space=smem, size = 0x4, offset = 0x4, fixed_abs, tag = 'smem constant byte address 0x4 - core index']
  #allocation1 [shape = 'u32[72,128]{1,0:T(1,128)}', space=vmem, size = 0x9000, scoped, tag = 'internal scratch']
  %s0 = inlined_call_operand.vmem [shape: f32[2,8,8,16], index: 0, kind: input, shape index: {}]
  %s1 = inlined_call_operand.vmem [shape: f32[2,8,16], index: 1, kind: input, shape index: {}]
  %s2 = inlined_call_operand.hbm [shape: f32[2,8,16], index: 2, kind: input, shape index: {}]
  %s3 = inlined_call_operand.hbm [shape: f32[2,8,8,32], index: 3, kind: input, shape index: {}]
  %s4 = inlined_call_operand.hbm [shape: f32[2,8,8,32], index: 4, kind: input, shape index: {}]
  %s5 = inlined_call_operand.vmem [shape: f32[32,16], index: 5, kind: input, shape index: {}]
  %s6 = inlined_call_operand.vmem [shape: f32[32,16], index: 6, kind: input, shape index: {}]
  %s7 = inlined_call_operand.vmem [shape: f32[32,16], index: 7, kind: input, shape index: {}]
  %s8 = inlined_call_operand.hbm [shape: f32[32,32], index: 8, kind: input, shape index: {}]
  %s9 = inlined_call_operand.hbm [shape: f32[32,32], index: 9, kind: input, shape index: {}]
  %s10 = inlined_call_operand.vmem [shape: f32[1,32], index: 10, kind: input, shape index: {}]
  %s11 = inlined_call_operand.hbm [shape: f32[2,8,8,32], index: 11, kind: output, shape index: {}]
  %s12 = sld [smem:[#allocation0]]
  $region97: #{tpu_custom_call.1} parent=0
    _
  %s14 = ssub.s32 1, %s12
  %s15 = scalar_select 0, %s14, %s12
  $region1: #{tpu_custom_call.1} parent=0
    #allocation2 [shape = 'u8[8192]{0}', space=vmem, size = 0x2000, scoped, tag = 'input window, operand 2']
    #allocation3 [shape = 's32[2]{0}', space=sflag, size = 0x8, scoped, tag = 'scoped memory for tpu_custom_call.1']
    #allocation4 [shape = 's32[2]{0}', space=sflag, size = 0x8, scoped, tag = 'scoped memory for tpu_custom_call.1']
    #allocation5 [shape = 'u8[65536]{0}', space=vmem, size = 0x10000, scoped, tag = 'input window, operand 3']
    #allocation6 [shape = 's32[2]{0}', space=sflag, size = 0x8, scoped, tag = 'scoped memory for tpu_custom_call.1']
    #allocation7 [shape = 'u8[65536]{0}', space=vmem, size = 0x10000, scoped, tag = 'input window, operand 4']
    #allocation8 [shape = 'u8[16384]{0}', space=vmem, size = 0x4000, scoped, tag = 'input window, operand 8, single buffered']
    #allocation9 [shape = 's32[1]{0}', space=sflag, size = 0x4, scoped, tag = 'scoped memory for tpu_custom_call.1']
    #allocation10 [shape = 'u8[16384]{0}', space=vmem, size = 0x4000, scoped, tag = 'input window, operand 9, single buffered']
    #allocation11 [shape = 'u8[65536]{0}', space=vmem, size = 0x10000, scoped, tag = 'output window, operand 0']
    %16 = vsyncpa [#allocation3], 0
    %s17 = scalar_lea.sflag [#allocation3], 1
    %18 = vsyncpa %s17, 0
    %19 = vsyncpa [#allocation6], 0
    %s20 = scalar_lea.sflag [#allocation6], 1
    %21 = vsyncpa %s20, 0
    %22 = vsyncpa [#allocation9], 0
    %23 = vsyncpa [#allocation4], 0
    %s24 = scalar_lea.sflag [#allocation4], 1
    %25 = vsyncpa %s24, 0
    loop: start=0, step=1, limit=4
    $region2: #{tpu_custom_call.1} parent=1 // loop_pre_header
      _
    $region3: #{tpu_custom_call.1} parent=1 // loop_header
      %s27 = sphi 0, %s31
      %p28 = scmp.ge.s32.totalorder %s27, 4
      %s34 = sphi 0, %s46
      %s35 = sphi 0, %s42
      %s36 = sphi 0, %s34
      %s37 = sphi 0, %s35
      %s38 = sphi 0, %s36
      %s39 = sphi 0, %s37
      %s51 = sphi 0, %s53
      %s54 = sphi 0, %s51
      %s55 = sphi 0, %s54
      %s71 = sphi 0, %s55
      %s77 = sphi 0, %s79
      %s80 = sphi 0, %s77
      %s81 = sphi 0, %s80
      %s97 = sphi 0, %s81
      %s105 = sphi 0, %s107
      %s108 = sphi 0, %s105
      %s109 = sphi 0, %s108
      %s125 = sphi 0, %s109
      %s133 = sphi 0, %s135
      %s136 = sphi 0, %s133
      %s137 = sphi 0, %s136
      %s153 = sphi 0, %s137
      %s161 = sphi 0, %s163
      %s164 = sphi 0, %s161
      %s165 = sphi 0, %s164
      %s181 = sphi 0, %s165
      %s185 = sphi 0, %s185
      %s187 = sphi 0, %s185
      %s188 = sphi 0, %s187
      %s202 = sphi 0, %s188
      %s206 = sphi 0, %s206
      %s208 = sphi 0, %s206
      %s209 = sphi 0, %s208
      %s223 = sphi 0, %s209
      %s227 = sphi 0, %s227
      %s229 = sphi 0, %s227
      %s230 = sphi 0, %s229
      %s244 = sphi 0, %s230
      %s248 = sphi 0, %s248
      %s250 = sphi 0, %s248
      %s251 = sphi 0, %s250
      %s265 = sphi 0, %s251
      %s269 = sphi 0, %s269
      %s271 = sphi 0, %s269
      %s272 = sphi 0, %s271
      %s286 = sphi 0, %s272
      %s290 = sphi 0, %s290
      %s292 = sphi 0, %s290
      %s293 = sphi 0, %s292
      %s307 = sphi 0, %s293
      %s315 = sphi 0, %s317
      %s318 = sphi 0, %s315
      %s319 = sphi 0, %s318
      %s335 = sphi 0, %s319
    $region4: #{tpu_custom_call.1} parent=1 // loop_header_branch
      %30 = sbr.rel (%p28) target = $region8
    $region5: #{tpu_custom_call.1} parent=1 // loop_body
      %s32 = ssub.s32 %s27, 1
      %s33 = ssub.s32 %s27, 2
      %s40 = sadd.s32 1, %s35
      %p41 = scmp.ge.s32.totalorder %s40, 1
      %s42 = scalar_select %p41, 0, %s40
      %s43 = sadd.s32 1, %s34
      %s44 = scalar_select %p41, %s43, %s34
      %p45 = scmp.ge.s32.totalorder %s44, 2
      %s46 = scalar_select %p45, 0, %s44
      %s47 = ssub.s32 %s34, %s46
      %s48 = ssub.s32 %s35, %s42
      %s49 = sor.u32 %s47, %s48
      %p50 = scmp.eq.s32.totalorder %s49, 0
      %s52 = sadd.s32 %s51, 1
      %s53 = scalar_select %p50, %s51, %s52
      %p56 = pneg %p50
      %p57 = scmp.eq.s32.totalorder %s27, 1
      %p58 = por %p56, %p57
      %p59 = scmp.ne.s32.totalorder %s51, %s54
      %p60 = scmp.eq.s32.totalorder %s27, 0
      %p61 = por %p59, %p60
      %p62 = scmp.ne.s32.totalorder %s51, %s54
      %p63 = scmp.eq.s32.totalorder %s32, 1
      %p64 = por %p62, %p63
      %p65 = scmp.ne.s32.totalorder %s54, %s55
      %p66 = scmp.eq.s32.totalorder %s32, 0
      %p67 = por %p65, %p66
      %p68 = scmp.ne.s32.totalorder %s54, %s55
      %p69 = scmp.eq.s32.totalorder %s33, 1
      %p70 = por %p68, %p69
      %p72 = scmp.ne.s32.totalorder %s55, %s71
      %p73 = scmp.eq.s32.totalorder %s33, 0
      %p74 = por %p72, %p73
      %s75 = ssub.s32 %s34, %s46
      %p76 = scmp.eq.s32.totalorder %s75, 0
      %s78 = sadd.s32 %s77, 1
      %s79 = scalar_select %p76, %s77, %s78
      %p82 = pneg %p76
      %p83 = scmp.eq.s32.totalorder %s27, 1
      %p84 = por %p82, %p83
      %p85 = scmp.ne.s32.totalorder %s77, %s80
      %p86 = scmp.eq.s32.totalorder %s27, 0
      %p87 = por %p85, %p86
      %p88 = scmp.ne.s32.totalorder %s77, %s80
      %p89 = scmp.eq.s32.totalorder %s32, 1
      %p90 = por %p88, %p89
      %p91 = scmp.ne.s32.totalorder %s80, %s81
      %p92 = scmp.eq.s32.totalorder %s32, 0
      %p93 = por %p91, %p92
      %p94 = scmp.ne.s32.totalorder %s80, %s81
      %p95 = scmp.eq.s32.totalorder %s33, 1
      %p96 = por %p94, %p95
      %p98 = scmp.ne.s32.totalorder %s81, %s97
      %p99 = scmp.eq.s32.totalorder %s33, 0
      %p100 = por %p98, %p99
      %s101 = ssub.s32 %s34, %s46
      %s102 = ssub.s32 %s35, %s42
      %s103 = sor.u32 %s101, %s102
      %p104 = scmp.eq.s32.totalorder %s103, 0
      %s106 = sadd.s32 %s105, 1
      %s107 = scalar_select %p104, %s105, %s106
      %p110 = pneg %p104
      %p111 = scmp.eq.s32.totalorder %s27, 1
      %p112 = por %p110, %p111
      %p113 = scmp.ne.s32.totalorder %s105, %s108
      %p114 = scmp.eq.s32.totalorder %s27, 0
      %p115 = por %p113, %p114
      %p116 = scmp.ne.s32.totalorder %s105, %s108
      %p117 = scmp.eq.s32.totalorder %s32, 1
      %p118 = por %p116, %p117
      %p119 = scmp.ne.s32.totalorder %s108, %s109
      %p120 = scmp.eq.s32.totalorder %s32, 0
      %p121 = por %p119, %p120
      %p122 = scmp.ne.s32.totalorder %s108, %s109
      %p123 = scmp.eq.s32.totalorder %s33, 1
      %p124 = por %p122, %p123
      %p126 = scmp.ne.s32.totalorder %s109, %s125
      %p127 = scmp.eq.s32.totalorder %s33, 0
      %p128 = por %p126, %p127
      %s129 = ssub.s32 %s34, %s46
      %s130 = ssub.s32 %s35, %s42
      %s131 = sor.u32 %s129, %s130
      %p132 = scmp.eq.s32.totalorder %s131, 0
      %s134 = sadd.s32 %s133, 1
      %s135 = scalar_select %p132, %s133, %s134
      %p138 = pneg %p132
      %p139 = scmp.eq.s32.totalorder %s27, 1
      %p140 = por %p138, %p139
      %p141 = scmp.ne.s32.totalorder %s133, %s136
      %p142 = scmp.eq.s32.totalorder %s27, 0
      %p143 = por %p141, %p142
      %p144 = scmp.ne.s32.totalorder %s133, %s136
      %p145 = scmp.eq.s32.totalorder %s32, 1
      %p146 = por %p144, %p145
      %p147 = scmp.ne.s32.totalorder %s136, %s137
      %p148 = scmp.eq.s32.totalorder %s32, 0
      %p149 = por %p147, %p148
      %p150 = scmp.ne.s32.totalorder %s136, %s137
      %p151 = scmp.eq.s32.totalorder %s33, 1
      %p152 = por %p150, %p151
      %p154 = scmp.ne.s32.totalorder %s137, %s153
      %p155 = scmp.eq.s32.totalorder %s33, 0
      %p156 = por %p154, %p155
      %s157 = ssub.s32 %s34, %s46
      %s158 = ssub.s32 %s35, %s42
      %s159 = sor.u32 %s157, %s158
      %p160 = scmp.eq.s32.totalorder %s159, 0
      %s162 = sadd.s32 %s161, 1
      %s163 = scalar_select %p160, %s161, %s162
      %p166 = pneg %p160
      %p167 = scmp.eq.s32.totalorder %s27, 1
      %p168 = por %p166, %p167
      %p169 = scmp.ne.s32.totalorder %s161, %s164
      %p170 = scmp.eq.s32.totalorder %s27, 0
      %p171 = por %p169, %p170
      %p172 = scmp.ne.s32.totalorder %s161, %s164
      %p173 = scmp.eq.s32.totalorder %s32, 1
      %p174 = por %p172, %p173
      %p175 = scmp.ne.s32.totalorder %s164, %s165
      %p176 = scmp.eq.s32.totalorder %s32, 0
      %p177 = por %p175, %p176
      %p178 = scmp.ne.s32.totalorder %s164, %s165
      %p179 = scmp.eq.s32.totalorder %s33, 1
      %p180 = por %p178, %p179
      %p182 = scmp.ne.s32.totalorder %s165, %s181
      %p183 = scmp.eq.s32.totalorder %s33, 0
      %p184 = por %p182, %p183
      %s186 = sadd.s32 %s185, 1
      %p189 = scmp.eq.s32.totalorder %s27, 1
      %p190 = scmp.ne.s32.totalorder %s185, %s187
      %p191 = scmp.eq.s32.totalorder %s27, 0
      %p192 = por %p190, %p191
      %p193 = scmp.ne.s32.totalorder %s185, %s187
      %p194 = scmp.eq.s32.totalorder %s32, 1
      %p195 = por %p193, %p194
      %p196 = scmp.ne.s32.totalorder %s187, %s188
      %p197 = scmp.eq.s32.totalorder %s32, 0
      %p198 = por %p196, %p197
      %p199 = scmp.ne.s32.totalorder %s187, %s188
      %p200 = scmp.eq.s32.totalorder %s33, 1
      %p201 = por %p199, %p200
      %p203 = scmp.ne.s32.totalorder %s188, %s202
      %p204 = scmp.eq.s32.totalorder %s33, 0
      %p205 = por %p203, %p204
      %s207 = sadd.s32 %s206, 1
      %p210 = scmp.eq.s32.totalorder %s27, 1
      %p211 = scmp.ne.s32.totalorder %s206, %s208
      %p212 = scmp.eq.s32.totalorder %s27, 0
      %p213 = por %p211, %p212
      %p214 = scmp.ne.s32.totalorder %s206, %s208
      %p215 = scmp.eq.s32.totalorder %s32, 1
      %p216 = por %p214, %p215
      %p217 = scmp.ne.s32.totalorder %s208, %s209
      %p218 = scmp.eq.s32.totalorder %s32, 0
      %p219 = por %p217, %p218
      %p220 = scmp.ne.s32.totalorder %s208, %s209
      %p221 = scmp.eq.s32.totalorder %s33, 1
      %p222 = por %p220, %p221
      %p224 = scmp.ne.s32.totalorder %s209, %s223
      %p225 = scmp.eq.s32.totalorder %s33, 0
      %p226 = por %p224, %p225
      %s228 = sadd.s32 %s227, 1
      %p231 = scmp.eq.s32.totalorder %s27, 1
      %p232 = scmp.ne.s32.totalorder %s227, %s229
      %p233 = scmp.eq.s32.totalorder %s27, 0
      %p234 = por %p232, %p233
      %p235 = scmp.ne.s32.totalorder %s227, %s229
      %p236 = scmp.eq.s32.totalorder %s32, 1
      %p237 = por %p235, %p236
      %p238 = scmp.ne.s32.totalorder %s229, %s230
      %p239 = scmp.eq.s32.totalorder %s32, 0
      %p240 = por %p238, %p239
      %p241 = scmp.ne.s32.totalorder %s229, %s230
      %p242 = scmp.eq.s32.totalorder %s33, 1
      %p243 = por %p241, %p242
      %p245 = scmp.ne.s32.totalorder %s230, %s244
      %p246 = scmp.eq.s32.totalorder %s33, 0
      %p247 = por %p245, %p246
      %s249 = sadd.s32 %s248, 1
      %p252 = scmp.eq.s32.totalorder %s27, 1
      %p253 = scmp.ne.s32.totalorder %s248, %s250
      %p254 = scmp.eq.s32.totalorder %s27, 0
      %p255 = por %p253, %p254
      %p256 = scmp.ne.s32.totalorder %s248, %s250
      %p257 = scmp.eq.s32.totalorder %s32, 1
      %p258 = por %p256, %p257
      %p259 = scmp.ne.s32.totalorder %s250, %s251
      %p260 = scmp.eq.s32.totalorder %s32, 0
      %p261 = por %p259, %p260
      %p262 = scmp.ne.s32.totalorder %s250, %s251
      %p263 = scmp.eq.s32.totalorder %s33, 1
      %p264 = por %p262, %p263
      %p266 = scmp.ne.s32.totalorder %s251, %s265
      %p267 = scmp.eq.s32.totalorder %s33, 0
      %p268 = por %p266, %p267
      %s270 = sadd.s32 %s269, 1
      %p273 = scmp.eq.s32.totalorder %s27, 1
      %p274 = scmp.ne.s32.totalorder %s269, %s271
      %p275 = scmp.eq.s32.totalorder %s27, 0
      %p276 = por %p274, %p275
      %p277 = scmp.ne.s32.totalorder %s269, %s271
      %p278 = scmp.eq.s32.totalorder %s32, 1
      %p279 = por %p277, %p278
      %p280 = scmp.ne.s32.totalorder %s271, %s272
      %p281 = scmp.eq.s32.totalorder %s32, 0
      %p282 = por %p280, %p281
      %p283 = scmp.ne.s32.totalorder %s271, %s272
      %p284 = scmp.eq.s32.totalorder %s33, 1
      %p285 = por %p283, %p284
      %p287 = scmp.ne.s32.totalorder %s272, %s286
      %p288 = scmp.eq.s32.totalorder %s33, 0
      %p289 = por %p287, %p288
      %s291 = sadd.s32 %s290, 1
      %p294 = scmp.eq.s32.totalorder %s27, 1
      %p295 = scmp.ne.s32.totalorder %s290, %s292
      %p296 = scmp.eq.s32.totalorder %s27, 0
      %p297 = por %p295, %p296
      %p298 = scmp.ne.s32.totalorder %s290, %s292
      %p299 = scmp.eq.s32.totalorder %s32, 1
      %p300 = por %p298, %p299
      %p301 = scmp.ne.s32.totalorder %s292, %s293
      %p302 = scmp.eq.s32.totalorder %s32, 0
      %p303 = por %p301, %p302
      %p304 = scmp.ne.s32.totalorder %s292, %s293
      %p305 = scmp.eq.s32.totalorder %s33, 1
      %p306 = por %p304, %p305
      %p308 = scmp.ne.s32.totalorder %s293, %s307
      %p309 = scmp.eq.s32.totalorder %s33, 0
      %p310 = por %p308, %p309
      %s311 = ssub.s32 %s34, %s46
      %s312 = ssub.s32 %s35, %s42
      %s313 = sor.u32 %s311, %s312
      %p314 = scmp.eq.s32.totalorder %s313, 0
      %s316 = sadd.s32 %s315, 1
      %s317 = scalar_select %p314, %s315, %s316
      %p320 = pneg %p314
      %p321 = scmp.eq.s32.totalorder %s27, 1
      %p322 = por %p320, %p321
      %p323 = scmp.ne.s32.totalorder %s315, %s318
      %p324 = scmp.eq.s32.totalorder %s27, 0
      %p325 = por %p323, %p324
      %p326 = scmp.ne.s32.totalorder %s315, %s318
      %p327 = scmp.eq.s32.totalorder %s32, 1
      %p328 = por %p326, %p327
      %p329 = scmp.ne.s32.totalorder %s318, %s319
      %p330 = scmp.eq.s32.totalorder %s32, 0
      %p331 = por %p329, %p330
      %p332 = scmp.ne.s32.totalorder %s318, %s319
      %p333 = scmp.eq.s32.totalorder %s33, 1
      %p334 = por %p332, %p333
      %p336 = scmp.ne.s32.totalorder %s319, %s335
      %p337 = scmp.eq.s32.totalorder %s33, 0
      %p338 = por %p336, %p337
      %p339 = scmp.le.s32.totalorder 1, %s27
      %p340 = scmp.lt.s32.totalorder %s27, 3
      %p341 = pnand %p339, %p340
      %p342 = pneg %p341
      // Predicated region
      $region9: #{tpu_custom_call.1} parent=5 // pred_check
        _
      $region10: #{tpu_custom_call.1} parent=5 // pred_check_branch
        %344 = sbr.rel (%p341) target = $region12
      $region11: #{tpu_custom_call.1} parent=5 // pred_region
        %s345 = ssub.s32 %s27, 1
        // Predicated region
        $region13: #{tpu_custom_call.1} parent=11 // pred_check
          %p346 = pneg %p198
        $region14: #{tpu_custom_call.1} parent=11 // pred_check_branch
          %348 = sbr.rel (%p346) target = $region16
        $region15: #{tpu_custom_call.1} parent=11 // pred_region
          _
        $region16: #{tpu_custom_call.1} parent=11 // pred_fallthru
          _
        // Predicated region
        $region17: #{tpu_custom_call.1} parent=11 // pred_check
          %p349 = pneg %p219
        $region18: #{tpu_custom_call.1} parent=11 // pred_check_branch
          %351 = sbr.rel (%p349) target = $region20
        $region19: #{tpu_custom_call.1} parent=11 // pred_region
          _
        $region20: #{tpu_custom_call.1} parent=11 // pred_fallthru
          _
        // Predicated region
        $region21: #{tpu_custom_call.1} parent=11 // pred_check
          %p352 = pneg %p240
        $region22: #{tpu_custom_call.1} parent=11 // pred_check_branch
          %354 = sbr.rel (%p352) target = $region24
        $region23: #{tpu_custom_call.1} parent=11 // pred_region
          _
        $region24: #{tpu_custom_call.1} parent=11 // pred_fallthru
          _
        // Predicated region
        $region25: #{tpu_custom_call.1} parent=11 // pred_check
          %p355 = pneg %p261
        $region26: #{tpu_custom_call.1} parent=11 // pred_check_branch
          %357 = sbr.rel (%p355) target = $region28
        $region27: #{tpu_custom_call.1} parent=11 // pred_region
          %359 = vsyncadd [#allocation9], 0
          %s360 = sshll.u32 %s8, 4
          %s361 = int_to_ptr.hbm [resolvable:$true] %s360
          %s362 = sshll.u32 [#allocation8], 4
          %s363 = int_to_ptr.vmem [resolvable:$true] %s362
          %368 = dma.hbm_to_vmem [thread:$0]  %s361, 512, %s363, [#allocation9], 128, 128, 8
        $region28: #{tpu_custom_call.1} parent=11 // pred_fallthru
          _
        // Predicated region
        $region29: #{tpu_custom_call.1} parent=11 // pred_check
          %p369 = pneg %p282
        $region30: #{tpu_custom_call.1} parent=11 // pred_check_branch
          %371 = sbr.rel (%p369) target = $region32
        $region31: #{tpu_custom_call.1} parent=11 // pred_region
          %373 = vsyncadd [#allocation9], 0
          %s374 = sshll.u32 %s9, 4
          %s375 = int_to_ptr.hbm [resolvable:$true] %s374
          %s376 = sshll.u32 [#allocation10], 4
          %s377 = int_to_ptr.vmem [resolvable:$true] %s376
          %382 = dma.hbm_to_vmem [thread:$0]  %s375, 512, %s377, [#allocation9], 128, 128, 8
        $region32: #{tpu_custom_call.1} parent=11 // pred_fallthru
          _
        // Predicated region
        $region33: #{tpu_custom_call.1} parent=11 // pred_check
          %p383 = pneg %p303
        $region34: #{tpu_custom_call.1} parent=11 // pred_check_branch
          %385 = sbr.rel (%p383) target = $region36
        $region35: #{tpu_custom_call.1} parent=11 // pred_region
          _
        $region36: #{tpu_custom_call.1} parent=11 // pred_fallthru
          _
      $region12: #{tpu_custom_call.1} parent=5 // pred_fallthru
        _
      %p386 = scmp.lt.s32.totalorder %s27, 2
      // Predicated region
      $region37: #{tpu_custom_call.1} parent=5 // pred_check
        %p387 = pneg %p386
      $region38: #{tpu_custom_call.1} parent=5 // pred_check_branch
        %389 = sbr.rel (%p387) target = $region40
      $region39: #{tpu_custom_call.1} parent=5 // pred_region
        // Predicated region
        $region41: #{tpu_custom_call.1} parent=39 // pred_check
          %p390 = pneg %p61
        $region42: #{tpu_custom_call.1} parent=39 // pred_check_branch
          %392 = sbr.rel (%p390) target = $region44
        $region43: #{tpu_custom_call.1} parent=39 // pred_region
          %s393 = smul.u32 8, %s35
          %p394 = scmp.lt.s32.totalorder %s34, 1
          %s395 = scalar_select %p394, %s34, 1
          %p396 = scmp.lt.s32.totalorder %s393, 7
          %s397 = scalar_select %p396, %s393, 7
          %s398 = smul.addr %s395, 8
          %s399 = sadd.s32 %s397, %s398
          %s400 = smul.addr %s399, 8
          %s401 = scalar_lea.vmem %s0, %s400
          %s402 = smul.u32 8, %s35
        $region44: #{tpu_custom_call.1} parent=39 // pred_fallthru
          _
        // Predicated region
        $region45: #{tpu_custom_call.1} parent=39 // pred_check
          %p403 = pneg %p87
        $region46: #{tpu_custom_call.1} parent=39 // pred_check_branch
          %405 = sbr.rel (%p403) target = $region48
        $region47: #{tpu_custom_call.1} parent=39 // pred_region
          %p406 = scmp.lt.s32.totalorder %s34, 1
          %s407 = scalar_select %p406, %s34, 1
          %s408 = smul.addr %s407, 8
          %s409 = scalar_lea.vmem %s1, %s408
        $region48: #{tpu_custom_call.1} parent=39 // pred_fallthru
          _
        // Predicated region
        $region49: #{tpu_custom_call.1} parent=39 // pred_check
          %p410 = pneg %p115
        $region50: #{tpu_custom_call.1} parent=39 // pred_check_branch
          %412 = sbr.rel (%p410) target = $region52
        $region51: #{tpu_custom_call.1} parent=39 // pred_region
          %s413 = sand.u32 %s105, 1
          %s414 = scalar_lea.sflag [#allocation3], %s413
          %s415 = sand.u32 %s105, 1
          %s416 = smul.addr %s415, 8
          %s417 = scalar_lea.vmem [#allocation2], %s416
          %419 = vsyncadd %s414, 0
          %s420 = sadd.s32 %s35, %s34
          %s421 = smul.addr %s420, 8
          %s422 = scalar_lea.hbm %s2, %s421
          %s424 = sshll.u32 %s422, 4
          %s425 = int_to_ptr.hbm [resolvable:$true] %s424
          %s426 = sshll.u32 %s417, 4
          %s427 = int_to_ptr.vmem [resolvable:$true] %s426
          %429 = dma.hbm_to_vmem [thread:$0]  %s425, 128, %s427, %s414
        $region52: #{tpu_custom_call.1} parent=39 // pred_fallthru
          _
        // Predicated region
        $region53: #{tpu_custom_call.1} parent=39 // pred_check
          %p430 = pneg %p143
        $region54: #{tpu_custom_call.1} parent=39 // pred_check_branch
          %432 = sbr.rel (%p430) target = $region56
        $region55: #{tpu_custom_call.1} parent=39 // pred_region
          %s433 = sand.u32 %s27, 1
          %s434 = scalar_lea.sflag [#allocation6], %s433
          %s435 = sand.u32 %s133, 1
          %s436 = smul.addr %s435, 64
          %s437 = scalar_lea.vmem [#allocation5], %s436
          %s438 = smul.u32 8, %s35
          %440 = vsyncadd %s434, 0
          %s441 = smul.addr %s34, 8
          %s442 = sadd.s32 %s438, %s441
          %s443 = smul.addr %s442, 8
          %s444 = scalar_lea.hbm %s3, %s443
          %s445 = sshll.u32 %s444, 4
          %s446 = int_to_ptr.hbm [resolvable:$true] %s445
          %s447 = sshll.u32 %s437, 4
          %s448 = int_to_ptr.vmem [resolvable:$true] %s447
          %453 = dma.hbm_to_vmem [thread:$0]  %s446, 1024, %s448, %s434, 128, 128, 8
        $region56: #{tpu_custom_call.1} parent=39 // pred_fallthru
          _
        // Predicated region
        $region57: #{tpu_custom_call.1} parent=39 // pred_check
          %p454 = pneg %p171
        $region58: #{tpu_custom_call.1} parent=39 // pred_check_branch
          %456 = sbr.rel (%p454) target = $region60
        $region59: #{tpu_custom_call.1} parent=39 // pred_region
          %s457 = sand.u32 %s27, 1
          %s458 = scalar_lea.sflag [#allocation6], %s457
          %s459 = sand.u32 %s161, 1
          %s460 = smul.addr %s459, 64
          %s461 = scalar_lea.vmem [#allocation7], %s460
          %s462 = smul.u32 8, %s35
          %464 = vsyncadd %s458, 0
          %s465 = smul.addr %s34, 8
          %s466 = sadd.s32 %s462, %s465
          %s467 = smul.addr %s466, 8
          %s468 = scalar_lea.hbm %s4, %s467
          %s469 = sshll.u32 %s468, 4
          %s470 = int_to_ptr.hbm [resolvable:$true] %s469
          %s471 = sshll.u32 %s461, 4
          %s472 = int_to_ptr.vmem [resolvable:$true] %s471
          %477 = dma.hbm_to_vmem [thread:$0]  %s470, 1024, %s472, %s458, 128, 128, 8
        $region60: #{tpu_custom_call.1} parent=39 // pred_fallthru
          _
      $region40: #{tpu_custom_call.1} parent=5 // pred_fallthru
        _
      %p478 = scmp.le.s32.totalorder 1, %s27
      %p479 = scmp.lt.s32.totalorder %s27, 3
      %p480 = pnand %p478, %p479
      %p481 = pneg %p480
      // Predicated region
      $region61: #{tpu_custom_call.1} parent=5 // pred_check
        _
      $region62: #{tpu_custom_call.1} parent=5 // pred_check_branch
        %483 = sbr.rel (%p480) target = $region64
      $region63: #{tpu_custom_call.1} parent=5 // pred_region
        %s484 = ssub.s32 %s27, 1
        %s485 = sand.u32 %s108, 1
        %s486 = scalar_lea.sflag [#allocation3], %s485
        %s487 = sand.u32 %s108, 1
        %s488 = smul.addr %s487, 8
        %s489 = scalar_lea.vmem [#allocation2], %s488
        // Predicated region
        $region65: #{tpu_custom_call.1} parent=63 // pred_check
          %p490 = pneg %p121
        $region66: #{tpu_custom_call.1} parent=63 // pred_check_branch
          %492 = sbr.rel (%p490) target = $region68
        $region67: #{tpu_custom_call.1} parent=63 // pred_region
          %494 = dma.done %s486, 128
        $region68: #{tpu_custom_call.1} parent=63 // pred_fallthru
          _
        %s495 = sand.u32 %s32, 1
        %s496 = scalar_lea.sflag [#allocation6], %s495
        %s497 = sand.u32 %s136, 1
        %s498 = smul.addr %s497, 64
        %s499 = scalar_lea.vmem [#allocation5], %s498
        // Predicated region
        $region69: #{tpu_custom_call.1} parent=63 // pred_check
          %p500 = pneg %p149
        $region70: #{tpu_custom_call.1} parent=63 // pred_check_branch
          %502 = sbr.rel (%p500) target = $region72
        $region71: #{tpu_custom_call.1} parent=63 // pred_region
          %504 = dma.done %s496, 1024
        $region72: #{tpu_custom_call.1} parent=63 // pred_fallthru
          _
        %s505 = sand.u32 %s32, 1
        %s506 = scalar_lea.sflag [#allocation6], %s505
        %s507 = sand.u32 %s164, 1
        %s508 = smul.addr %s507, 64
        %s509 = scalar_lea.vmem [#allocation7], %s508
        // Predicated region
        $region73: #{tpu_custom_call.1} parent=63 // pred_check
          %p510 = pneg %p177
        $region74: #{tpu_custom_call.1} parent=63 // pred_check_branch
          %512 = sbr.rel (%p510) target = $region76
        $region75: #{tpu_custom_call.1} parent=63 // pred_region
          %514 = dma.done %s506, 1024
        $region76: #{tpu_custom_call.1} parent=63 // pred_fallthru
          _
        // Predicated region
        $region77: #{tpu_custom_call.1} parent=63 // pred_check
          %p515 = pneg %p261
        $region78: #{tpu_custom_call.1} parent=63 // pred_check_branch
          %517 = sbr.rel (%p515) target = $region80
        $region79: #{tpu_custom_call.1} parent=63 // pred_region
          %519 = dma.done [#allocation9], 512
        $region80: #{tpu_custom_call.1} parent=63 // pred_fallthru
          _
        // Predicated region
        $region81: #{tpu_custom_call.1} parent=63 // pred_check
          %p520 = pneg %p282
        $region82: #{tpu_custom_call.1} parent=63 // pred_check_branch
          %522 = sbr.rel (%p520) target = $region84
        $region83: #{tpu_custom_call.1} parent=63 // pred_region
          %524 = dma.done [#allocation9], 512
        $region84: #{tpu_custom_call.1} parent=63 // pred_fallthru
          _
        %s525 = smul.u32 8, %s37
        %p526 = scmp.lt.s32.totalorder %s36, 1
        %s527 = scalar_select %p526, %s36, 1
        %p528 = scmp.lt.s32.totalorder %s525, 7
        %s529 = scalar_select %p528, %s525, 7
        %s530 = smul.addr %s527, 8
        %s531 = sadd.s32 %s529, %s530
        %s532 = smul.addr %s531, 8
        %s533 = scalar_lea.vmem %s0, %s532
        %p534 = pneg %p67
        %p535 = pneg %p64
        %p536 = scmp.lt.s32.totalorder %s36, 1
        %s537 = scalar_select %p536, %s36, 1
        %s538 = smul.addr %s537, 8
        %s539 = scalar_lea.vmem %s1, %s538
        %p540 = pneg %p93
        %p541 = pneg %p90
        %s542 = sand.u32 %s108, 1
        %s543 = scalar_lea.sflag [#allocation3], %s542
        %s544 = sand.u32 %s108, 1
        %s545 = smul.addr %s544, 8
        %s546 = scalar_lea.vmem [#allocation2], %s545
        %p547 = pneg %p121
        %p548 = pneg %p118
        %s549 = sand.u32 %s32, 1
        %s550 = scalar_lea.sflag [#allocation6], %s549
        %s551 = sand.u32 %s136, 1
        %s552 = smul.addr %s551, 64
        %s553 = scalar_lea.vmem [#allocation5], %s552
        %p554 = pneg %p149
        %p555 = pneg %p146
        %s556 = sand.u32 %s32, 1
        %s557 = scalar_lea.sflag [#allocation6], %s556
        %s558 = sand.u32 %s164, 1
        %s559 = smul.addr %s558, 64
        %s560 = scalar_lea.vmem [#allocation7], %s559
        %p561 = pneg %p177
        %p562 = pneg %p174
        %p563 = pneg %p198
        %p564 = pneg %p195
        %p565 = pneg %p219
        %p566 = pneg %p216
        %p567 = pneg %p240
        %p568 = pneg %p237
        %p569 = pneg %p261
        %p570 = pneg %p258
        %p571 = pneg %p282
        %p572 = pneg %p279
        %p573 = pneg %p303
        %p574 = pneg %p300
        %p575 = pneg %p331
        %p576 = pneg %p328
        %s577 = sand.u32 %s318, 1
        %s578 = scalar_lea.sflag [#allocation4], %s577
        %s579 = sand.u32 %s318, 1
        %s580 = smul.addr %s579, 64
        %s581 = scalar_lea.vmem [#allocation11], %s580
        %s582 = smul.u32 8, %s37
        %p583 = scmp.lt.s32.totalorder %s36, 1
        %s584 = scalar_select %p583, %s36, 1
        %p585 = scmp.lt.s32.totalorder %s582, 7
        %s586 = scalar_select %p585, %s582, 7
        %s587 = smul.addr %s584, 8
        %s588 = sadd.s32 %s586, %s587
        %s589 = smul.addr %s588, 8
        %s590 = scalar_lea.vmem %s0, %s589
        %s591 = smul.u32 8, %s37
        %p592 = scmp.lt.s32.totalorder %s36, 1
        %s593 = scalar_select %p592, %s36, 1
        %s594 = smul.addr %s593, 8
        %s595 = scalar_lea.vmem %s1, %s594
        %s596 = smul.u32 8, %s37
        %s597 = smul.u32 8, %s37
        %s598 = smul.u32 8, %s37
        %v599 = vld [vmem:[%s590] sm:$0xff]
        %v600 = vld [vmem:[%s590 + $0x8] sm:$0xff]
        %v601 = vld [vmem:[%s590 + $0x10] sm:$0xff]
        %v602 = vld [vmem:[%s590 + $0x18] sm:$0xff]
        %v603 = vld [vmem:[%s590 + $0x20] sm:$0xff]
        %v604 = vld [vmem:[%s590 + $0x28] sm:$0xff]
        %v605 = vld [vmem:[%s590 + $0x30] sm:$0xff]
        %v606 = vld [vmem:[%s590 + $0x38] sm:$0xff]
        %v607 = vld [vmem:[%s499] sm:$0xff]
        %v608 = vld [vmem:[%s499 + $0x8] sm:$0xff]
        %v609 = vld [vmem:[%s499 + $0x10] sm:$0xff]
        %v610 = vld [vmem:[%s499 + $0x18] sm:$0xff]
        %v611 = vld [vmem:[%s499 + $0x20] sm:$0xff]
        %v612 = vld [vmem:[%s499 + $0x28] sm:$0xff]
        %v613 = vld [vmem:[%s499 + $0x30] sm:$0xff]
        %v614 = vld [vmem:[%s499 + $0x38] sm:$0xff]
        %v615 = vld [vmem:[%s509] sm:$0xff]
        %v616 = vld [vmem:[%s509 + $0x8] sm:$0xff]
        %v617 = vld [vmem:[%s509 + $0x10] sm:$0xff]
        %v618 = vld [vmem:[%s509 + $0x18] sm:$0xff]
        %v619 = vld [vmem:[%s509 + $0x20] sm:$0xff]
        %v620 = vld [vmem:[%s509 + $0x28] sm:$0xff]
        %v621 = vld [vmem:[%s509 + $0x30] sm:$0xff]
        %v622 = vld [vmem:[%s509 + $0x38] sm:$0xff]
        %v623 = vld [vmem:[%s5] sm:$0xff]
        %v624 = vld [vmem:[%s5 + $0x8] sm:$0xff]
        %v625 = vld [vmem:[%s5 + $0x10] sm:$0xff]
        %v626 = vld [vmem:[%s5 + $0x18] sm:$0xff]
        %v627 = vld [vmem:[#allocation8] sm:$0xff]
        %v628 = vld [vmem:[#allocation8 + $0x8] sm:$0xff]
        %v629 = vld [vmem:[#allocation8 + $0x10] sm:$0xff]
        %v630 = vld [vmem:[#allocation8 + $0x18] sm:$0xff]
        %vm631 = vcmask 261120
        %v633 = vsel %vm631, %v607, 0
        %v636 = vsel %vm631, %v608, 0
        %v639 = vsel %vm631, %v609, 0
        %v642 = vsel %vm631, %v610, 0
        %v645 = vsel %vm631, %v611, 0
        %v648 = vsel %vm631, %v612, 0
        %v651 = vsel %vm631, %v613, 0
        %v654 = vsel %vm631, %v614, 0
        %v657 = vsel %vm631, %v627, 0
        %v660 = vsel %vm631, %v628, 0
        %v663 = vsel %vm631, %v629, 0
        %v666 = vsel %vm631, %v630, 0
        %668 = vmatpush.xpose.msra.mxu0 0.0
        %669 = vmatpush.xpose.msra.mxu0 0.0
        %670 = vmatpush.xpose.msra.mxu0 0.0
        %671 = vmatpush.xpose.msra.mxu0 0.0
        %672 = vmatpush.xpose.msra.mxu0 0.0
        %673 = vmatpush.xpose.msra.mxu0 0.0
        %674 = vmatpush.xpose.msra.mxu0 0.0
        %675 = vmatpush.xpose.msra.mxu0 0.0
        %676 = vmatpush.xpose.msra.mxu0 0.0
        %677 = vmatpush.xpose.msra.mxu0 0.0
        %678 = vmatpush.xpose.msra.mxu0 0.0
        %679 = vmatpush.xpose.msra.mxu0 0.0
        %680 = vmatpush.xpose.msra.mxu0 %v666
        %681 = vmatpush.xpose.msra.mxu0 %v663
        %682 = vmatpush.xpose.msra.mxu0 %v660
        %683 = vmatpush.xpose.msra.mxu0 %v657
        %684 = vmatmul.f32.gmra.mxu0 %v633
        %v685 = vpop.f32.mrf.mxu0
        %v686 = vadd.f32 0.0, %v685
        %687 = vmatmul.f32.gmra.mxu0 %v636
        %v688 = vpop.f32.mrf.mxu0
        %v689 = vadd.f32 0.0, %v688
        %690 = vmatmul.f32.gmra.mxu0 %v639
        %v691 = vpop.f32.mrf.mxu0
        %v692 = vadd.f32 0.0, %v691
        %693 = vmatmul.f32.gmra.mxu0 %v642
        %v694 = vpop.f32.mrf.mxu0
        %v695 = vadd.f32 0.0, %v694
        %696 = vmatmul.f32.gmra.mxu0 %v645
        %v697 = vpop.f32.mrf.mxu0
        %v698 = vadd.f32 0.0, %v697
        %699 = vmatmul.f32.gmra.mxu0 %v648
        %v700 = vpop.f32.mrf.mxu0
        %v701 = vadd.f32 0.0, %v700
        %702 = vmatmul.f32.gmra.mxu0 %v651
        %v703 = vpop.f32.mrf.mxu0
        %v704 = vadd.f32 0.0, %v703
        %705 = vmatmul.f32.gmra.mxu0 %v654
        %v706 = vpop.f32.mrf.mxu0
        %v707 = vadd.f32 0.0, %v706
        %708 = vdwg.mxu0
        %vm709 = vcmask 130048
        %v711 = vsel %vm709, %v599, 0
        %v714 = vsel %vm709, %v600, 0
        %v717 = vsel %vm709, %v601, 0
        %v720 = vsel %vm709, %v602, 0
        %v723 = vsel %vm709, %v603, 0
        %v726 = vsel %vm709, %v604, 0
        %v729 = vsel %vm709, %v605, 0
        %v732 = vsel %vm709, %v606, 0
        %v735 = vsel %vm709, %v623, 0
        %v738 = vsel %vm709, %v624, 0
        %v741 = vsel %vm709, %v625, 0
        %v744 = vsel %vm709, %v626, 0
        %746 = vmatpush.xpose.msra.mxu0 0.0
        %747 = vmatpush.xpose.msra.mxu0 0.0
        %748 = vmatpush.xpose.msra.mxu0 0.0
        %749 = vmatpush.xpose.msra.mxu0 0.0
        %750 = vmatpush.xpose.msra.mxu0 0.0
        %751 = vmatpush.xpose.msra.mxu0 0.0
        %752 = vmatpush.xpose.msra.mxu0 0.0
        %753 = vmatpush.xpose.msra.mxu0 0.0
        %754 = vmatpush.xpose.msra.mxu0 0.0
        %755 = vmatpush.xpose.msra.mxu0 0.0
        %756 = vmatpush.xpose.msra.mxu0 0.0
        %757 = vmatpush.xpose.msra.mxu0 0.0
        %758 = vmatpush.xpose.msra.mxu0 %v744
        %759 = vmatpush.xpose.msra.mxu0 %v741
        %760 = vmatpush.xpose.msra.mxu0 %v738
        %761 = vmatpush.xpose.msra.mxu0 %v735
        %762 = vmatmul.f32.gmra.mxu0 %v711
        %v763 = vpop.f32.mrf.mxu0
        %v764 = vadd.f32 %v686, %v763
        %765 = vmatmul.f32.gmra.mxu0 %v714
        %v766 = vpop.f32.mrf.mxu0
        %v767 = vadd.f32 %v689, %v766
        %768 = vmatmul.f32.gmra.mxu0 %v717
        %v769 = vpop.f32.mrf.mxu0
        %v770 = vadd.f32 %v692, %v769
        %771 = vmatmul.f32.gmra.mxu0 %v720
        %v772 = vpop.f32.mrf.mxu0
        %v773 = vadd.f32 %v695, %v772
        %774 = vmatmul.f32.gmra.mxu0 %v723
        %v775 = vpop.f32.mrf.mxu0
        %v776 = vadd.f32 %v698, %v775
        %777 = vmatmul.f32.gmra.mxu0 %v726
        %v778 = vpop.f32.mrf.mxu0
        %v779 = vadd.f32 %v701, %v778
        %780 = vmatmul.f32.gmra.mxu0 %v729
        %v781 = vpop.f32.mrf.mxu0
        %v782 = vadd.f32 %v704, %v781
        %783 = vmatmul.f32.gmra.mxu0 %v732
        %v784 = vpop.f32.mrf.mxu0
        %v785 = vadd.f32 %v707, %v784
        %786 = vdwg.mxu0
        %v787 = vld [vmem:[#allocation10] sm:$0xff]
        %v788 = vld [vmem:[#allocation10 + $0x8] sm:$0xff]
        %v789 = vld [vmem:[#allocation10 + $0x10] sm:$0xff]
        %v790 = vld [vmem:[#allocation10 + $0x18] sm:$0xff]
        %v792 = vsel %vm631, %v615, 0
        %v795 = vsel %vm631, %v616, 0
        %v798 = vsel %vm631, %v617, 0
        %v801 = vsel %vm631, %v618, 0
        %v804 = vsel %vm631, %v619, 0
        %v807 = vsel %vm631, %v620, 0
        %v810 = vsel %vm631, %v621, 0
        %v813 = vsel %vm631, %v622, 0
        %v816 = vsel %vm631, %v787, 0
        %v819 = vsel %vm631, %v788, 0
        %v822 = vsel %vm631, %v789, 0
        %v825 = vsel %vm631, %v790, 0
        %827 = vmatpush.xpose.msra.mxu0 0.0
        %828 = vmatpush.xpose.msra.mxu0 0.0
        %829 = vmatpush.xpose.msra.mxu0 0.0
        %830 = vmatpush.xpose.msra.mxu0 0.0
        %831 = vmatpush.xpose.msra.mxu0 0.0
        %832 = vmatpush.xpose.msra.mxu0 0.0
        %833 = vmatpush.xpose.msra.mxu0 0.0
        %834 = vmatpush.xpose.msra.mxu0 0.0
        %835 = vmatpush.xpose.msra.mxu0 0.0
        %836 = vmatpush.xpose.msra.mxu0 0.0
        %837 = vmatpush.xpose.msra.mxu0 0.0
        %838 = vmatpush.xpose.msra.mxu0 0.0
        %839 = vmatpush.xpose.msra.mxu0 %v825
        %840 = vmatpush.xpose.msra.mxu0 %v822
        %841 = vmatpush.xpose.msra.mxu0 %v819
        %842 = vmatpush.xpose.msra.mxu0 %v816
        %843 = vmatmul.f32.gmra.mxu0 %v792
        %v844 = vpop.f32.mrf.mxu0
        %v845 = vadd.f32 0.0, %v844
        %846 = vmatmul.f32.gmra.mxu0 %v795
        %v847 = vpop.f32.mrf.mxu0
        %v848 = vadd.f32 0.0, %v847
        %849 = vmatmul.f32.gmra.mxu0 %v798
        %v850 = vpop.f32.mrf.mxu0
        %v851 = vadd.f32 0.0, %v850
        %852 = vmatmul.f32.gmra.mxu0 %v801
        %v853 = vpop.f32.mrf.mxu0
        %v854 = vadd.f32 0.0, %v853
        %855 = vmatmul.f32.gmra.mxu0 %v804
        %v856 = vpop.f32.mrf.mxu0
        %v857 = vadd.f32 0.0, %v856
        %858 = vmatmul.f32.gmra.mxu0 %v807
        %v859 = vpop.f32.mrf.mxu0
        %v860 = vadd.f32 0.0, %v859
        %861 = vmatmul.f32.gmra.mxu0 %v810
        %v862 = vpop.f32.mrf.mxu0
        %v863 = vadd.f32 0.0, %v862
        %864 = vmatmul.f32.gmra.mxu0 %v813
        %v865 = vpop.f32.mrf.mxu0
        %v866 = vadd.f32 0.0, %v865
        %867 = vdwg.mxu0
        %v868 = vadd.f32 %v764, %v845
        %v869 = vadd.f32 %v767, %v848
        %v870 = vadd.f32 %v770, %v851
        %v871 = vadd.f32 %v773, %v854
        %v872 = vadd.f32 %v776, %v857
        %v873 = vadd.f32 %v779, %v860
        %v874 = vadd.f32 %v782, %v863
        %v875 = vadd.f32 %v785, %v866
        %v876 = vld [vmem:[%s595] sm:$0xff]
        %v877 = vld [vmem:[%s6] sm:$0xff]
        %v878 = vld [vmem:[%s6 + $0x8] sm:$0xff]
        %v879 = vld [vmem:[%s6 + $0x10] sm:$0xff]
        %v880 = vld [vmem:[%s6 + $0x18] sm:$0xff]
        %v881 = vld [vmem:[%s10] sm:$0x1]
        %v883 = vperm.slane %v881, 0
        %v886 = vsel %vm709, %v876, 0
        %v889 = vsel %vm709, %v877, 0
        %v892 = vsel %vm709, %v878, 0
        %v895 = vsel %vm709, %v879, 0
        %v898 = vsel %vm709, %v880, 0
        %900 = vmatpush.xpose.msra.mxu0 0.0
        %901 = vmatpush.xpose.msra.mxu0 0.0
        %902 = vmatpush.xpose.msra.mxu0 0.0
        %903 = vmatpush.xpose.msra.mxu0 0.0
        %904 = vmatpush.xpose.msra.mxu0 0.0
        %905 = vmatpush.xpose.msra.mxu0 0.0
        %906 = vmatpush.xpose.msra.mxu0 0.0
        %907 = vmatpush.xpose.msra.mxu0 0.0
        %908 = vmatpush.xpose.msra.mxu0 0.0
        %909 = vmatpush.xpose.msra.mxu0 0.0
        %910 = vmatpush.xpose.msra.mxu0 0.0
        %911 = vmatpush.xpose.msra.mxu0 0.0
        %912 = vmatpush.xpose.msra.mxu0 %v898
        %913 = vmatpush.xpose.msra.mxu0 %v895
        %914 = vmatpush.xpose.msra.mxu0 %v892
        %915 = vmatpush.xpose.msra.mxu0 %v889
        %916 = vmatmul.f32.gmra.mxu0 %v886
        %v917 = vpop.f32.mrf.mxu0
        %v918 = vadd.f32 %v883, %v917
        %919 = vdwg.mxu0
        %v920 = vld [vmem:[%s489] sm:$0xff]
        %v921 = vld [vmem:[%s7] sm:$0xff]
        %v922 = vld [vmem:[%s7 + $0x8] sm:$0xff]
        %v923 = vld [vmem:[%s7 + $0x10] sm:$0xff]
        %v924 = vld [vmem:[%s7 + $0x18] sm:$0xff]
        %v926 = vsel %vm709, %v920, 0
        %v929 = vsel %vm709, %v921, 0
        %v932 = vsel %vm709, %v922, 0
        %v935 = vsel %vm709, %v923, 0
        %v938 = vsel %vm709, %v924, 0
        %940 = vmatpush.xpose.msra.mxu0 0.0
        %941 = vmatpush.xpose.msra.mxu0 0.0
        %942 = vmatpush.xpose.msra.mxu0 0.0
        %943 = vmatpush.xpose.msra.mxu0 0.0
        %944 = vmatpush.xpose.msra.mxu0 0.0
        %945 = vmatpush.xpose.msra.mxu0 0.0
        %946 = vmatpush.xpose.msra.mxu0 0.0
        %947 = vmatpush.xpose.msra.mxu0 0.0
        %948 = vmatpush.xpose.msra.mxu0 0.0
        %949 = vmatpush.xpose.msra.mxu0 0.0
        %950 = vmatpush.xpose.msra.mxu0 0.0
        %951 = vmatpush.xpose.msra.mxu0 0.0
        %952 = vmatpush.xpose.msra.mxu0 %v938
        %953 = vmatpush.xpose.msra.mxu0 %v935
        %954 = vmatpush.xpose.msra.mxu0 %v932
        %955 = vmatpush.xpose.msra.mxu0 %v929
        %956 = vmatmul.f32.gmra.mxu0 %v926
        %v957 = vpop.f32.mrf.mxu0
        %v958 = vadd.f32 0.0, %v957
        %959 = vdwg.mxu0
        %v960 = vadd.f32 %v868, %v918
        %v961 = vadd.f32 %v869, %v918
        %v962 = vadd.f32 %v870, %v918
        %v963 = vadd.f32 %v871, %v918
        %v964 = vadd.f32 %v872, %v918
        %v965 = vadd.f32 %v873, %v918
        %v966 = vadd.f32 %v874, %v918
        %v967 = vadd.f32 %v875, %v918
        %v969 = vrot.slane %v958, 1
        %v970 = vrot.slane %v958, 2
        %v971 = vrot.slane %v958, 3
        %v972 = vrot.slane %v958, 4
        %v973 = vrot.slane %v958, 5
        %v974 = vrot.slane %v958, 6
        %v975 = vrot.slane %v958, 7
        %v976 = vperm.slane %v958, 0
        %v977 = vperm.slane %v969, 0
        %v978 = vperm.slane %v970, 0
        %v979 = vperm.slane %v971, 0
        %v980 = vperm.slane %v972, 0
        %v981 = vperm.slane %v973, 0
        %v982 = vperm.slane %v974, 0
        %v983 = vperm.slane %v975, 0
        %v992 = vadd.f32 %v960, %v976
        %v993 = vadd.f32 %v961, %v977
        %v994 = vadd.f32 %v962, %v978
        %v995 = vadd.f32 %v963, %v979
        %v996 = vadd.f32 %v964, %v980
        %v997 = vadd.f32 %v965, %v981
        %v998 = vadd.f32 %v966, %v982
        %v999 = vadd.f32 %v967, %v983
        %1000 = vst.msk [vmem:[%s581] sm:$0xff] %vm631, %v992
        %1001 = vst.msk [vmem:[%s581 + $0x8] sm:$0xff] %vm631, %v993
        %1002 = vst.msk [vmem:[%s581 + $0x10] sm:$0xff] %vm631, %v994
        %1003 = vst.msk [vmem:[%s581 + $0x18] sm:$0xff] %vm631, %v995
        %1004 = vst.msk [vmem:[%s581 + $0x20] sm:$0xff] %vm631, %v996
        %1005 = vst.msk [vmem:[%s581 + $0x28] sm:$0xff] %vm631, %v997
        %1006 = vst.msk [vmem:[%s581 + $0x30] sm:$0xff] %vm631, %v998
        %1007 = vst.msk [vmem:[%s581 + $0x38] sm:$0xff] %vm631, %v999
        %s1008 = sand.u32 %s318, 1
        %s1009 = scalar_lea.sflag [#allocation4], %s1008
        %s1010 = sand.u32 %s318, 1
        %s1011 = smul.addr %s1010, 64
        %s1012 = scalar_lea.vmem [#allocation11], %s1011
        // Predicated region
        $region85: #{tpu_custom_call.1} parent=63 // pred_check
          %p1013 = pneg %p328
        $region86: #{tpu_custom_call.1} parent=63 // pred_check_branch
          %1015 = sbr.rel (%p1013) target = $region88
        $region87: #{tpu_custom_call.1} parent=63 // pred_region
          %s1016 = smul.u32 8, %s37
          %1018 = vsyncadd %s1009, 0
          %s1019 = smul.addr %s36, 8
          %s1020 = sadd.s32 %s1016, %s1019
          %s1021 = smul.addr %s1020, 8
          %s1022 = scalar_lea.hbm %s11, %s1021
          %s1023 = sshll.u32 %s1012, 4
          %s1024 = int_to_ptr.vmem [resolvable:$true] %s1023
          %s1025 = sshll.u32 %s1022, 4
          %s1026 = int_to_ptr.hbm [resolvable:$true] %s1025
          %1031 = dma.vmem_to_hbm [thread:$0]  %s1024, 1024, %s1026, %s1009, 128, 128, 8
        $region88: #{tpu_custom_call.1} parent=63 // pred_fallthru
          _
      $region64: #{tpu_custom_call.1} parent=5 // pred_fallthru
        _
      %p1032 = scmp.le.s32.totalorder 2, %s27
      // Predicated region
      $region89: #{tpu_custom_call.1} parent=5 // pred_check
        %p1033 = pneg %p1032
      $region90: #{tpu_custom_call.1} parent=5 // pred_check_branch
        %1035 = sbr.rel (%p1033) target = $region92
      $region91: #{tpu_custom_call.1} parent=5 // pred_region
        %s1036 = ssub.s32 %s27, 2
        // Predicated region
        $region93: #{tpu_custom_call.1} parent=91 // pred_check
          %p1037 = pneg %p334
        $region94: #{tpu_custom_call.1} parent=91 // pred_check_branch
          %1039 = sbr.rel (%p1037) target = $region96
        $region95: #{tpu_custom_call.1} parent=91 // pred_region
          %s1040 = sand.u32 %s319, 1
          %s1041 = scalar_lea.sflag [#allocation4], %s1040
          %s1042 = sand.u32 %s319, 1
          %s1043 = smul.addr %s1042, 64
          %s1044 = scalar_lea.vmem [#allocation11], %s1043
          %1046 = dma.done %s1041, 1024
        $region96: #{tpu_custom_call.1} parent=91 // pred_fallthru
          _
      $region92: #{tpu_custom_call.1} parent=5 // pred_fallthru
        _
    $region6: #{tpu_custom_call.1} parent=1 // loop_footer
      %s31 = sadd.s32 1, %s27
    $region7: #{tpu_custom_call.1} parent=1 // loop_footer_branch
      %26 = sbr.rel target = $region3
    $region8: #{tpu_custom_call.1} parent=1 // loop_exit
      _
    %1047 = vsyncpa [#allocation3], 1
    %s1048 = scalar_lea.sflag [#allocation3], 1
    %1049 = vsyncpa %s1048, 1
    %1050 = vsyncpa [#allocation6], 1
    %s1051 = scalar_lea.sflag [#allocation6], 1
    %1052 = vsyncpa %s1051, 1
    %1053 = vsyncpa [#allocation9], 1
    %1054 = vsyncpa [#allocation4], 1
    %s1055 = scalar_lea.sflag [#allocation4], 1
    %1056 = vsyncpa %s1055, 1

</llo_original>
